<compile_context>
chip_gen: v7x
topology: tpu7x:2x2x1
jax: 0.10.0
libtpu: 0.0.40
codegen_flags: <defaults>
</compile_context>

<pallas_src>
import functools

import jax
import jax.numpy as jnp
from jax.experimental import pallas as pl
from jax.experimental.pallas import tpu as pltpu

_LANES = 128
_MAX_ROWS = 512          # sublane rows per grid step -> up to 65536 points/step
_NCH = 12                # folded camera channels: A0(3) | A1(3) | A2(3) | b(3)


def _cdiv(a, b):
    return -(-a // b)


def _round_up(a, b):
    return _cdiv(a, b) * b


# ---------------------------------------------------------------------------
# Kernel: per-point camera lookup from SMEM table + projective map + divide
# ---------------------------------------------------------------------------
def _project_kernel(table_ref, pts_ref, ids_ref, out_ref, *, num_cams):
    # table_ref: SMEM, flat ((num_cams+1) * 12,) f32 folded camera table
    # pts_ref:   VMEM, (3, rows, 128) f32   rows: px, py, pz  (SoA, lane-dense)
    # ids_ref:   VMEM, (rows, 128) int32    per-point camera index
    # out_ref:   VMEM, (2, rows, 128) f32   rows: y, x        (lane-dense)
    px = pts_ref[0]
    py = pts_ref[1]
    pz = pts_ref[2]
    ids = ids_ref[...]

    # Gather the 12 folded camera channels per point with a compare/select
    # sweep over the (tiny) SMEM table.  Accumulators start at the sentinel
    # row (A2 = (0,0,1), everything else 0 => qz = pz), so padded lanes
    # (id == num_cams) stay finite (pad point has pz = 1).
    zeros = jnp.zeros_like(px)
    ch = [zeros] * 8 + [jnp.ones_like(px)] + [zeros] * 3
    # TODO(synk): the select sweep is O(num_cameras) VALU work per point; for
    # large camera counts replace it with a lane dynamic-gather / one-hot MXU
    # matmul against a VMEM-resident table, or sort points by camera and pick
    # the table column via a scalar-prefetch index_map.
    for c in range(num_cams):
        m = ids == c
        base = c * _NCH
        ch = [jnp.where(m, table_ref[base + k], ch[k]) for k in range(_NCH)]

    a0x, a0y, a0z, a1x, a1y, a1z, a2x, a2y, a2z, b0, b1, b2 = ch

    nx = a0x * px + a0y * py + a0z * pz + b0      # fx*qx + ppx*qz
    ny = a1x * px + a1y * py + a1z * pz + b1      # fy*qy + ppy*qz
    qz = a2x * px + a2y * py + a2z * pz + b2      # camera-frame depth

    inv_z = pl.reciprocal(qz, approx=True)        # EUP op (free slot)
    inv_z = inv_z * (2.0 - qz * inv_z)            # one Newton step -> ~f32 exact

    out_ref[0, :, :] = ny * inv_z                 # y = qy/qz * fy + ppy
    out_ref[1, :, :] = nx * inv_z                 # x = qx/qz * fx + ppx


# ---------------------------------------------------------------------------
# Per-camera precompute (hoisted trig + intrinsics folding): flat SMEM table
# ---------------------------------------------------------------------------
def _build_projection_table(rotvecs, translations, f, pp):
    r = -jnp.asarray(rotvecs, jnp.float32)                 # R(-rotvec)
    t = jnp.asarray(translations, jnp.float32)
    f = jnp.asarray(f, jnp.float32)
    pp = jnp.asarray(pp, jnp.float32)

    theta = jnp.linalg.norm(r, axis=-1, keepdims=True)     # (C, 1)
    k = r / jnp.maximum(theta, 1e-12)                      # (C, 3)
    kx, ky, kz = k[:, 0], k[:, 1], k[:, 2]
    ct = jnp.cos(theta[:, 0])
    st = jnp.sin(theta[:, 0])
    oc = 1.0 - ct
    # Rodrigues matrix R = cos*I + sin*[k]_x + (1-cos)*k k^T
    R = jnp.stack([
        ct + oc * kx * kx, oc * kx * ky - st * kz, oc * kx * kz + st * ky,
        oc * ky * kx + st * kz, ct + oc * ky * ky, oc * ky * kz - st * kx,
        oc * kz * kx - st * ky, oc * kz * ky + st * kx, ct + oc * kz * kz,
    ], axis=-1).reshape(-1, 3, 3)                          # (C, 3, 3)

    fx, fy = f[:, 0:1], f[:, 1:2]
    ppx, ppy = pp[:, 0:1], pp[:, 1:2]
    a0 = fx * R[:, 0, :] + ppx * R[:, 2, :]                # (C, 3)
    a1 = fy * R[:, 1, :] + ppy * R[:, 2, :]                # (C, 3)
    a2 = R[:, 2, :]                                        # (C, 3)
    b0 = -jnp.sum(a0 * t, axis=-1, keepdims=True)          # (C, 1)
    b1 = -jnp.sum(a1 * t, axis=-1, keepdims=True)
    b2 = -jnp.sum(a2 * t, axis=-1, keepdims=True)

    table = jnp.concatenate([a0, a1, a2, b0, b1, b2], axis=-1)   # (C, 12)
    # Sentinel row for padded lanes: A2 = (0,0,1), everything else 0 -> qz = pz
    sentinel = jnp.zeros((1, _NCH), jnp.float32).at[0, 8].set(1.0)
    return jnp.concatenate([table, sentinel], axis=0).reshape(-1)  # ((C+1)*12,)


# ---------------------------------------------------------------------------
# Forward: tile points + cam ids, call kernel with SMEM-resident table
# ---------------------------------------------------------------------------
@jax.jit
def _project_forward(pcd, rotvecs, translations, f, pp, cam_idx):
    n = pcd.shape[0]
    num_cams = rotvecs.shape[0]

    table = _build_projection_table(rotvecs, translations, f, pp)

    # Tiling: n_pad = NP * 128 lanes, `rows` sublane rows per grid step.
    # Aim for >=2 grid steps when N allows it (v7x has 2 TensorCores), cap the
    # block at _MAX_ROWS rows; rows must be a multiple of 8.
    np_min = max(1, _cdiv(n, _LANES))
    rows = min(_MAX_ROWS, max(8, _round_up(_cdiv(np_min, 2), 8)))
    num_row_groups = _round_up(np_min, rows)
    n_pad = num_row_groups * _LANES
    grid = num_row_groups // rows

    # Pad with the sentinel camera (id == num_cams) and point (1,1,1) so the
    # padded lanes get qz == 1 -> finite (no NaN/inf before the final slice).
    idx = jnp.asarray(cam_idx, jnp.int32)
    idx_pad = jnp.pad(idx, (0, n_pad - n), constant_values=num_cams)
    ids2 = idx_pad.reshape(num_row_groups, _LANES)                  # (NP, 128)

    pts_soa = jnp.transpose(jnp.asarray(pcd, jnp.float32))          # (3, n)
    pts_soa = jnp.pad(pts_soa, ((0, 0), (0, n_pad - n)), constant_values=1.0)
    pts3 = pts_soa.reshape(3, num_row_groups, _LANES)               # (3, NP, 128)

    out3 = pl.pallas_call(
        functools.partial(_project_kernel, num_cams=num_cams),
        out_shape=jax.ShapeDtypeStruct((2, num_row_groups, _LANES), jnp.float32),
        grid_spec=pltpu.PrefetchScalarGridSpec(
            num_scalar_prefetch=0,
            grid=(grid,),
            in_specs=[
                # tiny folded camera table, whole-array resident in SMEM
                pl.BlockSpec(memory_space=pltpu.MemorySpace.SMEM),
                pl.BlockSpec((3, rows, _LANES), lambda i: (0, i, 0)),
                pl.BlockSpec((rows, _LANES), lambda i: (i, 0)),
            ],
            out_specs=pl.BlockSpec((2, rows, _LANES), lambda i: (0, i, 0)),
        ),
        compiler_params=pltpu.CompilerParams(
            dimension_semantics=("parallel",)),
    )(table, pts3, ids2)

    # API-mandated (N, 2) AoS return ([y, x] per point).  This transpose+slice
    # is one fused XLA copy (~16 B/pt); a SoA consumer could use `out3`
    # (= (2, N_pad) y-row / x-row) directly and skip it.
    return out3.reshape(2, n_pad).T[:n]


# ---------------------------------------------------------------------------
# Module-level wrappers (mirror the PyTorch module)
# ---------------------------------------------------------------------------
class CameraParameters:
    """Deterministic synthetic stand-in for facap's camera-parameter container."""

    def __init__(self, num_cameras, key):
        k1, k2, k3, k4 = jax.random.split(key, 4)
        self.rotvecs = 0.2 * jax.random.normal(k1, (num_cameras, 3), jnp.float32)
        self.translations = 0.5 * jax.random.normal(k2, (num_cameras, 3), jnp.float32)
        self.f = 500.0 + 10.0 * jax.random.normal(k3, (num_cameras, 2), jnp.float32)
        self.pp = 320.0 + 5.0 * jax.random.normal(k4, (num_cameras, 2), jnp.float32)

    def get_tensors(self, cam_ids):
        idx = jnp.asarray(cam_ids, jnp.int32)
        return (self.rotvecs[idx], self.translations[idx],
                self.f[idx], self.pp[idx])


class Project:
    def __init__(self, camera_parameters):
        self.camera_parameters = camera_parameters

    def __call__(self, pcd, cam_ids):
        if len(cam_ids) == 1:
            cam_ids = list(cam_ids) * len(pcd)
        cp = self.camera_parameters
        # Per-camera Rodrigues + intrinsics folding is hoisted inside
        # _project_forward; the per-point gather by cam_ids happens in-kernel.
        # Semantically identical to get_tensors() + per-point Rodrigues.
        return _project_forward(jnp.asarray(pcd, jnp.float32),
                                cp.rotvecs, cp.translations, cp.f, cp.pp,
                                jnp.asarray(cam_ids, jnp.int32))


def _reference(pcd, f, pp, rotvecs, translations):
    p = pcd - translations
    r = -rotvecs
    theta = jnp.linalg.norm(r, axis=-1, keepdims=True)
    k = r / jnp.maximum(theta, 1e-12)
    cos_t, sin_t = jnp.cos(theta), jnp.sin(theta)
    q = (p * cos_t + jnp.cross(k, p) * sin_t
         + k * jnp.sum(k * p, -1, keepdims=True) * (1.0 - cos_t))
    xy = q[:, :2] / q[:, 2:3] * f + pp
    return xy[:, ::-1]  # yx


if __name__ == "__main__":
    key = jax.random.PRNGKey(0)
    k_pts, k_cam, k_ids = jax.random.split(key, 3)

    n_points, n_cameras = 256, 4
    xy = jax.random.uniform(k_pts, (n_points, 2), jnp.float32, -1.0, 1.0)
    z = jax.random.uniform(jax.random.fold_in(k_pts, 1), (n_points, 1),
                           jnp.float32, 2.0, 6.0)
    pcd = jnp.concatenate([xy, z], axis=-1)                     # (N, 3)
    cam_ids = [int(c) for c in
               jax.random.randint(k_ids, (n_points,), 0, n_cameras)]

    cam_params = CameraParameters(n_cameras, k_cam)
    project = Project(cam_params)

    yxs = project(pcd, cam_ids)
    yxs = jax.block_until_ready(yxs)

    # sanity check vs pure-JAX per-point Rodrigues reference
    rot, tr, f, pp = cam_params.get_tensors(cam_ids)
    ref = _reference(pcd, f, pp, rot, tr)
    assert yxs.shape == (n_points, 2)
    assert jnp.allclose(yxs, ref, rtol=1e-4, atol=1e-2), "mismatch vs reference"

    print("KERNEL_OK")
</pallas_src>

<mosaic_0001>
module attributes {stable_mosaic.version = 11 : i64} {
  func.func @_project_kernel(%arg0: i32, %arg1: memref<60xf32, #tpu.memory_space<smem>>, %arg2: memref<3x8x128xf32, #tpu.memory_space<vmem>>, %arg3: memref<8x128xi32, #tpu.memory_space<vmem>>, %arg4: memref<2x8x128xf32, #tpu.memory_space<vmem>>) attributes {dimension_semantics = [#tpu.dimension_semantics<parallel>], iteration_bounds = array<i64: 1>, scalar_prefetch = 0 : i64, scratch_operands = 0 : i64, tpu.core_type = #tpu.core_type<tc>, window_params = [{transform_indices = @transform_0, window_bounds = array<i64: 60>}, {transform_indices = @transform_1, window_bounds = array<i64: 3, 8, 128>}, {transform_indices = @transform_2, window_bounds = array<i64: 8, 128>}, {transform_indices = @transform_3, window_bounds = array<i64: 2, 8, 128>}]} {
    %c0 = arith.constant 0 : index
    %c0_0 = arith.constant 0 : index
    %c0_1 = arith.constant 0 : index
    %0 = vector.load %arg2[%c0, %c0_0, %c0_1] : memref<3x8x128xf32, #tpu.memory_space<vmem>>, vector<1x8x128xf32>
    %1 = vector.shape_cast %0 : vector<1x8x128xf32> to vector<8x128xf32>
    %c1 = arith.constant 1 : index
    %c0_2 = arith.constant 0 : index
    %c0_3 = arith.constant 0 : index
    %2 = vector.load %arg2[%c1, %c0_2, %c0_3] : memref<3x8x128xf32, #tpu.memory_space<vmem>>, vector<1x8x128xf32>
    %3 = vector.shape_cast %2 : vector<1x8x128xf32> to vector<8x128xf32>
    %c2 = arith.constant 2 : index
    %c0_4 = arith.constant 0 : index
    %c0_5 = arith.constant 0 : index
    %4 = vector.load %arg2[%c2, %c0_4, %c0_5] : memref<3x8x128xf32, #tpu.memory_space<vmem>>, vector<1x8x128xf32>
    %5 = vector.shape_cast %4 : vector<1x8x128xf32> to vector<8x128xf32>
    %c0_6 = arith.constant 0 : index
    %c0_7 = arith.constant 0 : index
    %6 = vector.load %arg3[%c0_6, %c0_7] : memref<8x128xi32, #tpu.memory_space<vmem>>, vector<8x128xi32>
    %cst = arith.constant 0.000000e+00 : f32
    %7 = vector.broadcast %cst : f32 to vector<8x128xf32>
    %cst_8 = arith.constant 1.000000e+00 : f32
    %8 = vector.broadcast %cst_8 : f32 to vector<8x128xf32>
    %c0_i32 = arith.constant 0 : i32
    %9 = vector.broadcast %c0_i32 : i32 to vector<8x128xi32>
    %10 = arith.cmpi eq, %6, %9 : vector<8x128xi32>
    %c0_9 = arith.constant 0 : index
    %11 = memref.load %arg1[%c0_9] : memref<60xf32, #tpu.memory_space<smem>>
    %12 = vector.broadcast %11 : f32 to vector<8x128xf32>
    %13 = arith.select %10, %12, %7 : vector<8x128xi1>, vector<8x128xf32>
    %c1_10 = arith.constant 1 : index
    %14 = memref.load %arg1[%c1_10] : memref<60xf32, #tpu.memory_space<smem>>
    %15 = vector.broadcast %14 : f32 to vector<8x128xf32>
    %16 = arith.select %10, %15, %7 : vector<8x128xi1>, vector<8x128xf32>
    %c2_11 = arith.constant 2 : index
    %17 = memref.load %arg1[%c2_11] : memref<60xf32, #tpu.memory_space<smem>>
    %18 = vector.broadcast %17 : f32 to vector<8x128xf32>
    %19 = arith.select %10, %18, %7 : vector<8x128xi1>, vector<8x128xf32>
    %c3 = arith.constant 3 : index
    %20 = memref.load %arg1[%c3] : memref<60xf32, #tpu.memory_space<smem>>
    %21 = vector.broadcast %20 : f32 to vector<8x128xf32>
    %22 = arith.select %10, %21, %7 : vector<8x128xi1>, vector<8x128xf32>
    %c4 = arith.constant 4 : index
    %23 = memref.load %arg1[%c4] : memref<60xf32, #tpu.memory_space<smem>>
    %24 = vector.broadcast %23 : f32 to vector<8x128xf32>
    %25 = arith.select %10, %24, %7 : vector<8x128xi1>, vector<8x128xf32>
    %c5 = arith.constant 5 : index
    %26 = memref.load %arg1[%c5] : memref<60xf32, #tpu.memory_space<smem>>
    %27 = vector.broadcast %26 : f32 to vector<8x128xf32>
    %28 = arith.select %10, %27, %7 : vector<8x128xi1>, vector<8x128xf32>
    %c6 = arith.constant 6 : index
    %29 = memref.load %arg1[%c6] : memref<60xf32, #tpu.memory_space<smem>>
    %30 = vector.broadcast %29 : f32 to vector<8x128xf32>
    %31 = arith.select %10, %30, %7 : vector<8x128xi1>, vector<8x128xf32>
    %c7 = arith.constant 7 : index
    %32 = memref.load %arg1[%c7] : memref<60xf32, #tpu.memory_space<smem>>
    %33 = vector.broadcast %32 : f32 to vector<8x128xf32>
    %34 = arith.select %10, %33, %7 : vector<8x128xi1>, vector<8x128xf32>
    %c8 = arith.constant 8 : index
    %35 = memref.load %arg1[%c8] : memref<60xf32, #tpu.memory_space<smem>>
    %36 = vector.broadcast %35 : f32 to vector<8x128xf32>
    %37 = arith.select %10, %36, %8 : vector<8x128xi1>, vector<8x128xf32>
    %c9 = arith.constant 9 : index
    %38 = memref.load %arg1[%c9] : memref<60xf32, #tpu.memory_space<smem>>
    %39 = vector.broadcast %38 : f32 to vector<8x128xf32>
    %40 = arith.select %10, %39, %7 : vector<8x128xi1>, vector<8x128xf32>
    %c10 = arith.constant 10 : index
    %41 = memref.load %arg1[%c10] : memref<60xf32, #tpu.memory_space<smem>>
    %42 = vector.broadcast %41 : f32 to vector<8x128xf32>
    %43 = arith.select %10, %42, %7 : vector<8x128xi1>, vector<8x128xf32>
    %c11 = arith.constant 11 : index
    %44 = memref.load %arg1[%c11] : memref<60xf32, #tpu.memory_space<smem>>
    %45 = vector.broadcast %44 : f32 to vector<8x128xf32>
    %46 = arith.select %10, %45, %7 : vector<8x128xi1>, vector<8x128xf32>
    %c1_i32 = arith.constant 1 : i32
    %47 = vector.broadcast %c1_i32 : i32 to vector<8x128xi32>
    %48 = arith.cmpi eq, %6, %47 : vector<8x128xi32>
    %c12 = arith.constant 12 : index
    %49 = memref.load %arg1[%c12] : memref<60xf32, #tpu.memory_space<smem>>
    %50 = vector.broadcast %49 : f32 to vector<8x128xf32>
    %51 = arith.select %48, %50, %13 : vector<8x128xi1>, vector<8x128xf32>
    %c13 = arith.constant 13 : index
    %52 = memref.load %arg1[%c13] : memref<60xf32, #tpu.memory_space<smem>>
    %53 = vector.broadcast %52 : f32 to vector<8x128xf32>
    %54 = arith.select %48, %53, %16 : vector<8x128xi1>, vector<8x128xf32>
    %c14 = arith.constant 14 : index
    %55 = memref.load %arg1[%c14] : memref<60xf32, #tpu.memory_space<smem>>
    %56 = vector.broadcast %55 : f32 to vector<8x128xf32>
    %57 = arith.select %48, %56, %19 : vector<8x128xi1>, vector<8x128xf32>
    %c15 = arith.constant 15 : index
    %58 = memref.load %arg1[%c15] : memref<60xf32, #tpu.memory_space<smem>>
    %59 = vector.broadcast %58 : f32 to vector<8x128xf32>
    %60 = arith.select %48, %59, %22 : vector<8x128xi1>, vector<8x128xf32>
    %c16 = arith.constant 16 : index
    %61 = memref.load %arg1[%c16] : memref<60xf32, #tpu.memory_space<smem>>
    %62 = vector.broadcast %61 : f32 to vector<8x128xf32>
    %63 = arith.select %48, %62, %25 : vector<8x128xi1>, vector<8x128xf32>
    %c17 = arith.constant 17 : index
    %64 = memref.load %arg1[%c17] : memref<60xf32, #tpu.memory_space<smem>>
    %65 = vector.broadcast %64 : f32 to vector<8x128xf32>
    %66 = arith.select %48, %65, %28 : vector<8x128xi1>, vector<8x128xf32>
    %c18 = arith.constant 18 : index
    %67 = memref.load %arg1[%c18] : memref<60xf32, #tpu.memory_space<smem>>
    %68 = vector.broadcast %67 : f32 to vector<8x128xf32>
    %69 = arith.select %48, %68, %31 : vector<8x128xi1>, vector<8x128xf32>
    %c19 = arith.constant 19 : index
    %70 = memref.load %arg1[%c19] : memref<60xf32, #tpu.memory_space<smem>>
    %71 = vector.broadcast %70 : f32 to vector<8x128xf32>
    %72 = arith.select %48, %71, %34 : vector<8x128xi1>, vector<8x128xf32>
    %c20 = arith.constant 20 : index
    %73 = memref.load %arg1[%c20] : memref<60xf32, #tpu.memory_space<smem>>
    %74 = vector.broadcast %73 : f32 to vector<8x128xf32>
    %75 = arith.select %48, %74, %37 : vector<8x128xi1>, vector<8x128xf32>
    %c21 = arith.constant 21 : index
    %76 = memref.load %arg1[%c21] : memref<60xf32, #tpu.memory_space<smem>>
    %77 = vector.broadcast %76 : f32 to vector<8x128xf32>
    %78 = arith.select %48, %77, %40 : vector<8x128xi1>, vector<8x128xf32>
    %c22 = arith.constant 22 : index
    %79 = memref.load %arg1[%c22] : memref<60xf32, #tpu.memory_space<smem>>
    %80 = vector.broadcast %79 : f32 to vector<8x128xf32>
    %81 = arith.select %48, %80, %43 : vector<8x128xi1>, vector<8x128xf32>
    %c23 = arith.constant 23 : index
    %82 = memref.load %arg1[%c23] : memref<60xf32, #tpu.memory_space<smem>>
    %83 = vector.broadcast %82 : f32 to vector<8x128xf32>
    %84 = arith.select %48, %83, %46 : vector<8x128xi1>, vector<8x128xf32>
    %c2_i32 = arith.constant 2 : i32
    %85 = vector.broadcast %c2_i32 : i32 to vector<8x128xi32>
    %86 = arith.cmpi eq, %6, %85 : vector<8x128xi32>
    %c24 = arith.constant 24 : index
    %87 = memref.load %arg1[%c24] : memref<60xf32, #tpu.memory_space<smem>>
    %88 = vector.broadcast %87 : f32 to vector<8x128xf32>
    %89 = arith.select %86, %88, %51 : vector<8x128xi1>, vector<8x128xf32>
    %c25 = arith.constant 25 : index
    %90 = memref.load %arg1[%c25] : memref<60xf32, #tpu.memory_space<smem>>
    %91 = vector.broadcast %90 : f32 to vector<8x128xf32>
    %92 = arith.select %86, %91, %54 : vector<8x128xi1>, vector<8x128xf32>
    %c26 = arith.constant 26 : index
    %93 = memref.load %arg1[%c26] : memref<60xf32, #tpu.memory_space<smem>>
    %94 = vector.broadcast %93 : f32 to vector<8x128xf32>
    %95 = arith.select %86, %94, %57 : vector<8x128xi1>, vector<8x128xf32>
    %c27 = arith.constant 27 : index
    %96 = memref.load %arg1[%c27] : memref<60xf32, #tpu.memory_space<smem>>
    %97 = vector.broadcast %96 : f32 to vector<8x128xf32>
    %98 = arith.select %86, %97, %60 : vector<8x128xi1>, vector<8x128xf32>
    %c28 = arith.constant 28 : index
    %99 = memref.load %arg1[%c28] : memref<60xf32, #tpu.memory_space<smem>>
    %100 = vector.broadcast %99 : f32 to vector<8x128xf32>
    %101 = arith.select %86, %100, %63 : vector<8x128xi1>, vector<8x128xf32>
    %c29 = arith.constant 29 : index
    %102 = memref.load %arg1[%c29] : memref<60xf32, #tpu.memory_space<smem>>
    %103 = vector.broadcast %102 : f32 to vector<8x128xf32>
    %104 = arith.select %86, %103, %66 : vector<8x128xi1>, vector<8x128xf32>
    %c30 = arith.constant 30 : index
    %105 = memref.load %arg1[%c30] : memref<60xf32, #tpu.memory_space<smem>>
    %106 = vector.broadcast %105 : f32 to vector<8x128xf32>
    %107 = arith.select %86, %106, %69 : vector<8x128xi1>, vector<8x128xf32>
    %c31 = arith.constant 31 : index
    %108 = memref.load %arg1[%c31] : memref<60xf32, #tpu.memory_space<smem>>
    %109 = vector.broadcast %108 : f32 to vector<8x128xf32>
    %110 = arith.select %86, %109, %72 : vector<8x128xi1>, vector<8x128xf32>
    %c32 = arith.constant 32 : index
    %111 = memref.load %arg1[%c32] : memref<60xf32, #tpu.memory_space<smem>>
    %112 = vector.broadcast %111 : f32 to vector<8x128xf32>
    %113 = arith.select %86, %112, %75 : vector<8x128xi1>, vector<8x128xf32>
    %c33 = arith.constant 33 : index
    %114 = memref.load %arg1[%c33] : memref<60xf32, #tpu.memory_space<smem>>
    %115 = vector.broadcast %114 : f32 to vector<8x128xf32>
    %116 = arith.select %86, %115, %78 : vector<8x128xi1>, vector<8x128xf32>
    %c34 = arith.constant 34 : index
    %117 = memref.load %arg1[%c34] : memref<60xf32, #tpu.memory_space<smem>>
    %118 = vector.broadcast %117 : f32 to vector<8x128xf32>
    %119 = arith.select %86, %118, %81 : vector<8x128xi1>, vector<8x128xf32>
    %c35 = arith.constant 35 : index
    %120 = memref.load %arg1[%c35] : memref<60xf32, #tpu.memory_space<smem>>
    %121 = vector.broadcast %120 : f32 to vector<8x128xf32>
    %122 = arith.select %86, %121, %84 : vector<8x128xi1>, vector<8x128xf32>
    %c3_i32 = arith.constant 3 : i32
    %123 = vector.broadcast %c3_i32 : i32 to vector<8x128xi32>
    %124 = arith.cmpi eq, %6, %123 : vector<8x128xi32>
    %c36 = arith.constant 36 : index
    %125 = memref.load %arg1[%c36] : memref<60xf32, #tpu.memory_space<smem>>
    %126 = vector.broadcast %125 : f32 to vector<8x128xf32>
    %127 = arith.select %124, %126, %89 : vector<8x128xi1>, vector<8x128xf32>
    %c37 = arith.constant 37 : index
    %128 = memref.load %arg1[%c37] : memref<60xf32, #tpu.memory_space<smem>>
    %129 = vector.broadcast %128 : f32 to vector<8x128xf32>
    %130 = arith.select %124, %129, %92 : vector<8x128xi1>, vector<8x128xf32>
    %c38 = arith.constant 38 : index
    %131 = memref.load %arg1[%c38] : memref<60xf32, #tpu.memory_space<smem>>
    %132 = vector.broadcast %131 : f32 to vector<8x128xf32>
    %133 = arith.select %124, %132, %95 : vector<8x128xi1>, vector<8x128xf32>
    %c39 = arith.constant 39 : index
    %134 = memref.load %arg1[%c39] : memref<60xf32, #tpu.memory_space<smem>>
    %135 = vector.broadcast %134 : f32 to vector<8x128xf32>
    %136 = arith.select %124, %135, %98 : vector<8x128xi1>, vector<8x128xf32>
    %c40 = arith.constant 40 : index
    %137 = memref.load %arg1[%c40] : memref<60xf32, #tpu.memory_space<smem>>
    %138 = vector.broadcast %137 : f32 to vector<8x128xf32>
    %139 = arith.select %124, %138, %101 : vector<8x128xi1>, vector<8x128xf32>
    %c41 = arith.constant 41 : index
    %140 = memref.load %arg1[%c41] : memref<60xf32, #tpu.memory_space<smem>>
    %141 = vector.broadcast %140 : f32 to vector<8x128xf32>
    %142 = arith.select %124, %141, %104 : vector<8x128xi1>, vector<8x128xf32>
    %c42 = arith.constant 42 : index
    %143 = memref.load %arg1[%c42] : memref<60xf32, #tpu.memory_space<smem>>
    %144 = vector.broadcast %143 : f32 to vector<8x128xf32>
    %145 = arith.select %124, %144, %107 : vector<8x128xi1>, vector<8x128xf32>
    %c43 = arith.constant 43 : index
    %146 = memref.load %arg1[%c43] : memref<60xf32, #tpu.memory_space<smem>>
    %147 = vector.broadcast %146 : f32 to vector<8x128xf32>
    %148 = arith.select %124, %147, %110 : vector<8x128xi1>, vector<8x128xf32>
    %c44 = arith.constant 44 : index
    %149 = memref.load %arg1[%c44] : memref<60xf32, #tpu.memory_space<smem>>
    %150 = vector.broadcast %149 : f32 to vector<8x128xf32>
    %151 = arith.select %124, %150, %113 : vector<8x128xi1>, vector<8x128xf32>
    %c45 = arith.constant 45 : index
    %152 = memref.load %arg1[%c45] : memref<60xf32, #tpu.memory_space<smem>>
    %153 = vector.broadcast %152 : f32 to vector<8x128xf32>
    %154 = arith.select %124, %153, %116 : vector<8x128xi1>, vector<8x128xf32>
    %c46 = arith.constant 46 : index
    %155 = memref.load %arg1[%c46] : memref<60xf32, #tpu.memory_space<smem>>
    %156 = vector.broadcast %155 : f32 to vector<8x128xf32>
    %157 = arith.select %124, %156, %119 : vector<8x128xi1>, vector<8x128xf32>
    %c47 = arith.constant 47 : index
    %158 = memref.load %arg1[%c47] : memref<60xf32, #tpu.memory_space<smem>>
    %159 = vector.broadcast %158 : f32 to vector<8x128xf32>
    %160 = arith.select %124, %159, %122 : vector<8x128xi1>, vector<8x128xf32>
    %161 = arith.mulf %127, %1 : vector<8x128xf32>
    %162 = arith.mulf %130, %3 : vector<8x128xf32>
    %163 = arith.addf %161, %162 : vector<8x128xf32>
    %164 = arith.mulf %133, %5 : vector<8x128xf32>
    %165 = arith.addf %163, %164 : vector<8x128xf32>
    %166 = arith.addf %165, %154 : vector<8x128xf32>
    %167 = arith.mulf %136, %1 : vector<8x128xf32>
    %168 = arith.mulf %139, %3 : vector<8x128xf32>
    %169 = arith.addf %167, %168 : vector<8x128xf32>
    %170 = arith.mulf %142, %5 : vector<8x128xf32>
    %171 = arith.addf %169, %170 : vector<8x128xf32>
    %172 = arith.addf %171, %157 : vector<8x128xf32>
    %173 = arith.mulf %145, %1 : vector<8x128xf32>
    %174 = arith.mulf %148, %3 : vector<8x128xf32>
    %175 = arith.addf %173, %174 : vector<8x128xf32>
    %176 = arith.mulf %151, %5 : vector<8x128xf32>
    %177 = arith.addf %175, %176 : vector<8x128xf32>
    %178 = arith.addf %177, %160 : vector<8x128xf32>
    %179 = tpu.reciprocal %178 {approx = true} : vector<8x128xf32> -> vector<8x128xf32>
    %180 = arith.mulf %178, %179 : vector<8x128xf32>
    %cst_12 = arith.constant 2.000000e+00 : f32
    %181 = vector.broadcast %cst_12 : f32 to vector<8x128xf32>
    %182 = arith.subf %181, %180 : vector<8x128xf32>
    %183 = arith.mulf %179, %182 : vector<8x128xf32>
    %184 = arith.mulf %172, %183 : vector<8x128xf32>
    %c0_13 = arith.constant 0 : index
    %c0_14 = arith.constant 0 : index
    %c0_15 = arith.constant 0 : index
    %185 = vector.load %arg4[%c0_13, %c0_14, %c0_15] : memref<2x8x128xf32, #tpu.memory_space<vmem>>, vector<1x8x128xf32>
    %186 = vector.shape_cast %185 : vector<1x8x128xf32> to vector<8x128xf32>
    %187 = vector.shape_cast %184 : vector<8x128xf32> to vector<1x8x128xf32>
    tpu.vector_store %arg4[%c0_13, %c0_14, %c0_15], %187 {strides = array<i32>} : memref<2x8x128xf32, #tpu.memory_space<vmem>>, vector<1x8x128xf32>,
    %188 = arith.mulf %166, %183 : vector<8x128xf32>
    %c1_16 = arith.constant 1 : index
    %c0_17 = arith.constant 0 : index
    %c0_18 = arith.constant 0 : index
    %189 = vector.load %arg4[%c1_16, %c0_17, %c0_18] : memref<2x8x128xf32, #tpu.memory_space<vmem>>, vector<1x8x128xf32>
    %190 = vector.shape_cast %189 : vector<1x8x128xf32> to vector<8x128xf32>
    %191 = vector.shape_cast %188 : vector<8x128xf32> to vector<1x8x128xf32>
    tpu.vector_store %arg4[%c1_16, %c0_17, %c0_18], %191 {strides = array<i32>} : memref<2x8x128xf32, #tpu.memory_space<vmem>>, vector<1x8x128xf32>,
    return
  }
  func.func @transform_0(%arg0: i32) -> i32 {
    %c0_i32 = arith.constant 0 : i32
    %c0_i32_0 = arith.constant 0 : i32
    return %c0_i32 : i32
  }
  func.func @transform_1(%arg0: i32) -> (i32, i32, i32) {
    %c0_i32 = arith.constant 0 : i32
    %c0_i32_0 = arith.constant 0 : i32
    %c0_i32_1 = arith.constant 0 : i32
    return %c0_i32, %arg0, %c0_i32_0 : i32, i32, i32
  }
  func.func @transform_2(%arg0: i32) -> (i32, i32) {
    %c0_i32 = arith.constant 0 : i32
    %c0_i32_0 = arith.constant 0 : i32
    return %arg0, %c0_i32 : i32, i32
  }
  func.func @transform_3(%arg0: i32) -> (i32, i32, i32) {
    %c0_i32 = arith.constant 0 : i32
    %c0_i32_0 = arith.constant 0 : i32
    %c0_i32_1 = arith.constant 0 : i32
    return %c0_i32, %arg0, %c0_i32_0 : i32, i32, i32
  }
}

</mosaic_0001>

<llo_original>
// kernel: _project_forward.1
$region0: #{_project_forward.1}
  #allocation0 [shape = 'u32[]', space=smem, size = 0x4, offset = 0x4, fixed_abs, tag = 'smem constant byte address 0x4 - core index']
  #allocation1 [shape = 'u32[144,128]{1,0:T(1,128)}', space=vmem, size = 0x12000, scoped, tag = 'internal scratch']
  %s0 = inlined_call_operand.vmem [shape: f32[60], index: 0, kind: input, shape index: {}]
  %s1 = inlined_call_operand.vmem [shape: f32[3,8,128], index: 1, kind: input, shape index: {}]
  %s2 = inlined_call_operand.vmem [shape: s32[8,128], index: 2, kind: input, shape index: {}]
  %s3 = inlined_call_operand.vmem [shape: f32[2,8,128], index: 3, kind: output, shape index: {}]
  %s4 = sld [smem:[#allocation0]]
  $region26: #{_project_forward.1} parent=0
    _
  %s6 = ssub.s32 1, %s4
  %s7 = scalar_select 0, %s6, %s4
  $region1: #{_project_forward.1} parent=0
    #allocation2 [shape = 'u8[512]{0}', space=smem, size = 0x200, scoped, tag = 'input window, operand 0, single buffered']
    #allocation3 [shape = 's32[1]{0}', space=sflag, size = 0x4, scoped, tag = 'scoped memory for _project_forward.1']
    %8 = vsyncpa [#allocation3], 0
    // Predicated region
    $region2: #{_project_forward.1} parent=1 // pred_check
      _
    $region3: #{_project_forward.1} parent=1 // pred_check_branch
      %10 = sbr.rel (0) target = $region5
    $region4: #{_project_forward.1} parent=1 // pred_region
      %s12 = ssub.s32 16, 16
      %13 = vsyncadd [#allocation3], %s12
      %s15 = sshll.u32 %s0, 4
      %s16 = int_to_ptr.vmem [resolvable:$true] %s15
      %18 = dma.vmem_to_smem %s16, 16, [#allocation2], [#allocation3]
    $region5: #{_project_forward.1} parent=1 // pred_fallthru
      _
    // Predicated region
    $region6: #{_project_forward.1} parent=1 // pred_check
      _
    $region7: #{_project_forward.1} parent=1 // pred_check_branch
      %20 = sbr.rel (0) target = $region9
    $region8: #{_project_forward.1} parent=1 // pred_region
      _
    $region9: #{_project_forward.1} parent=1 // pred_fallthru
      _
    // Predicated region
    $region10: #{_project_forward.1} parent=1 // pred_check
      _
    $region11: #{_project_forward.1} parent=1 // pred_check_branch
      %22 = sbr.rel (0) target = $region13
    $region12: #{_project_forward.1} parent=1 // pred_region
      _
    $region13: #{_project_forward.1} parent=1 // pred_fallthru
      _
    // Predicated region
    $region14: #{_project_forward.1} parent=1 // pred_check
      _
    $region15: #{_project_forward.1} parent=1 // pred_check_branch
      %24 = sbr.rel (0) target = $region17
    $region16: #{_project_forward.1} parent=1 // pred_region
      %25 = dma.done [#allocation3], 16
    $region17: #{_project_forward.1} parent=1 // pred_fallthru
      _
    %26 = sfence
    %v27 = vld [vmem:[%s1] sm:$0xff]
    %s28 = scalar_lea.vmem %s1, 8
    %v29 = vld [vmem:[%s28] sm:$0xff]
    %s30 = scalar_lea.vmem %s1, 16
    %v31 = vld [vmem:[%s30] sm:$0xff]
    %v32 = vld [vmem:[%s2] sm:$0xff]
    %vm33 = vcmp.eq.s32.totalorder %v32, 0
    %s34 = sld [smem:[#allocation2]]
    %v35 = vstv %s34
    %v36 = vsel %vm33, %v35, 0.0
    %s37 = sld [smem:[#allocation2 + $0x1]]
    %v38 = vstv %s37
    %v39 = vsel %vm33, %v38, 0.0
    %s40 = sld [smem:[#allocation2 + $0x2]]
    %v41 = vstv %s40
    %v42 = vsel %vm33, %v41, 0.0
    %s43 = sld [smem:[#allocation2 + $0x3]]
    %v44 = vstv %s43
    %v45 = vsel %vm33, %v44, 0.0
    %s46 = sld [smem:[#allocation2 + $0x4]]
    %v47 = vstv %s46
    %v48 = vsel %vm33, %v47, 0.0
    %s49 = sld [smem:[#allocation2 + $0x5]]
    %v50 = vstv %s49
    %v51 = vsel %vm33, %v50, 0.0
    %s52 = sld [smem:[#allocation2 + $0x6]]
    %v53 = vstv %s52
    %v54 = vsel %vm33, %v53, 0.0
    %s55 = sld [smem:[#allocation2 + $0x7]]
    %v56 = vstv %s55
    %v57 = vsel %vm33, %v56, 0.0
    %s58 = sld [smem:[#allocation2 + $0x8]]
    %v59 = vstv %s58
    %v60 = vsel %vm33, %v59, 1.0
    %s61 = sld [smem:[#allocation2 + $0x9]]
    %v62 = vstv %s61
    %v63 = vsel %vm33, %v62, 0.0
    %s64 = sld [smem:[#allocation2 + $0xa]]
    %v65 = vstv %s64
    %v66 = vsel %vm33, %v65, 0.0
    %s67 = sld [smem:[#allocation2 + $0xb]]
    %v68 = vstv %s67
    %v69 = vsel %vm33, %v68, 0.0
    %vm70 = vcmp.eq.s32.totalorder %v32, 1
    %s71 = sld [smem:[#allocation2 + $0xc]]
    %v72 = vstv %s71
    %v73 = vsel %vm70, %v72, %v36
    %s74 = sld [smem:[#allocation2 + $0xd]]
    %v75 = vstv %s74
    %v76 = vsel %vm70, %v75, %v39
    %s77 = sld [smem:[#allocation2 + $0xe]]
    %v78 = vstv %s77
    %v79 = vsel %vm70, %v78, %v42
    %s80 = sld [smem:[#allocation2 + $0xf]]
    %v81 = vstv %s80
    %v82 = vsel %vm70, %v81, %v45
    %s83 = sld [smem:[#allocation2 + $0x10]]
    %v84 = vstv %s83
    %v85 = vsel %vm70, %v84, %v48
    %s86 = sld [smem:[#allocation2 + $0x11]]
    %v87 = vstv %s86
    %v88 = vsel %vm70, %v87, %v51
    %s89 = sld [smem:[#allocation2 + $0x12]]
    %v90 = vstv %s89
    %v91 = vsel %vm70, %v90, %v54
    %s92 = sld [smem:[#allocation2 + $0x13]]
    %v93 = vstv %s92
    %v94 = vsel %vm70, %v93, %v57
    %s95 = sld [smem:[#allocation2 + $0x14]]
    %v96 = vstv %s95
    %v97 = vsel %vm70, %v96, %v60
    %s98 = sld [smem:[#allocation2 + $0x15]]
    %v99 = vstv %s98
    %v100 = vsel %vm70, %v99, %v63
    %s101 = sld [smem:[#allocation2 + $0x16]]
    %v102 = vstv %s101
    %v103 = vsel %vm70, %v102, %v66
    %s104 = sld [smem:[#allocation2 + $0x17]]
    %v105 = vstv %s104
    %v106 = vsel %vm70, %v105, %v69
    %vm107 = vcmp.eq.s32.totalorder %v32, 2
    %s108 = sld [smem:[#allocation2 + $0x18]]
    %v109 = vstv %s108
    %v110 = vsel %vm107, %v109, %v73
    %s111 = sld [smem:[#allocation2 + $0x19]]
    %v112 = vstv %s111
    %v113 = vsel %vm107, %v112, %v76
    %s114 = sld [smem:[#allocation2 + $0x1a]]
    %v115 = vstv %s114
    %v116 = vsel %vm107, %v115, %v79
    %s117 = sld [smem:[#allocation2 + $0x1b]]
    %v118 = vstv %s117
    %v119 = vsel %vm107, %v118, %v82
    %s120 = sld [smem:[#allocation2 + $0x1c]]
    %v121 = vstv %s120
    %v122 = vsel %vm107, %v121, %v85
    %s123 = sld [smem:[#allocation2 + $0x1d]]
    %v124 = vstv %s123
    %v125 = vsel %vm107, %v124, %v88
    %s126 = sld [smem:[#allocation2 + $0x1e]]
    %v127 = vstv %s126
    %v128 = vsel %vm107, %v127, %v91
    %s129 = sld [smem:[#allocation2 + $0x1f]]
    %v130 = vstv %s129
    %v131 = vsel %vm107, %v130, %v94
    %s132 = sld [smem:[#allocation2 + $0x20]]
    %v133 = vstv %s132
    %v134 = vsel %vm107, %v133, %v97
    %s135 = sld [smem:[#allocation2 + $0x21]]
    %v136 = vstv %s135
    %v137 = vsel %vm107, %v136, %v100
    %s138 = sld [smem:[#allocation2 + $0x22]]
    %v139 = vstv %s138
    %v140 = vsel %vm107, %v139, %v103
    %s141 = sld [smem:[#allocation2 + $0x23]]
    %v142 = vstv %s141
    %v143 = vsel %vm107, %v142, %v106
    %vm144 = vcmp.eq.s32.totalorder %v32, 3
    %s145 = sld [smem:[#allocation2 + $0x24]]
    %v146 = vstv %s145
    %v147 = vsel %vm144, %v146, %v110
    %s148 = sld [smem:[#allocation2 + $0x25]]
    %v149 = vstv %s148
    %v150 = vsel %vm144, %v149, %v113
    %s151 = sld [smem:[#allocation2 + $0x26]]
    %v152 = vstv %s151
    %v153 = vsel %vm144, %v152, %v116
    %s154 = sld [smem:[#allocation2 + $0x27]]
    %v155 = vstv %s154
    %v156 = vsel %vm144, %v155, %v119
    %s157 = sld [smem:[#allocation2 + $0x28]]
    %v158 = vstv %s157
    %v159 = vsel %vm144, %v158, %v122
    %s160 = sld [smem:[#allocation2 + $0x29]]
    %v161 = vstv %s160
    %v162 = vsel %vm144, %v161, %v125
    %s163 = sld [smem:[#allocation2 + $0x2a]]
    %v164 = vstv %s163
    %v165 = vsel %vm144, %v164, %v128
    %s166 = sld [smem:[#allocation2 + $0x2b]]
    %v167 = vstv %s166
    %v168 = vsel %vm144, %v167, %v131
    %s169 = sld [smem:[#allocation2 + $0x2c]]
    %v170 = vstv %s169
    %v171 = vsel %vm144, %v170, %v134
    %s172 = sld [smem:[#allocation2 + $0x2d]]
    %v173 = vstv %s172
    %v174 = vsel %vm144, %v173, %v137
    %s175 = sld [smem:[#allocation2 + $0x2e]]
    %v176 = vstv %s175
    %v177 = vsel %vm144, %v176, %v140
    %s178 = sld [smem:[#allocation2 + $0x2f]]
    %v179 = vstv %s178
    %v180 = vsel %vm144, %v179, %v143
    %v181 = vmul.f32 %v147, %v27
    %v182 = vmul.f32 %v150, %v29
    %v183 = vadd.f32 %v181, %v182
    %v184 = vmul.f32 %v153, %v31
    %v185 = vadd.f32 %v183, %v184
    %v186 = vadd.f32 %v185, %v174
    %v187 = vmul.f32 %v156, %v27
    %v188 = vmul.f32 %v159, %v29
    %v189 = vadd.f32 %v187, %v188
    %v190 = vmul.f32 %v162, %v31
    %v191 = vadd.f32 %v189, %v190
    %v192 = vadd.f32 %v191, %v177
    %v193 = vmul.f32 %v165, %v27
    %v194 = vmul.f32 %v168, %v29
    %v195 = vadd.f32 %v193, %v194
    %v196 = vmul.f32 %v171, %v31
    %v197 = vadd.f32 %v195, %v196
    %v198 = vadd.f32 %v197, %v180
    %v199 = vrcp.pop %v198
    %v200 = vmul.f32 %v198, %v199
    %v201 = vsub.f32 2.0, %v200
    %v202 = vmul.f32 %v199, %v201
    %v203 = vmul.f32 %v192, %v202
    %204 = vst [vmem:[%s3] sm:$0xff] %v203
    %v205 = vmul.f32 %v186, %v202
    %s206 = scalar_lea.vmem %s3, 8
    %207 = vst [vmem:[%s206] sm:$0xff] %v205
    // Predicated region
    $region18: #{_project_forward.1} parent=1 // pred_check
      _
    $region19: #{_project_forward.1} parent=1 // pred_check_branch
      %209 = sbr.rel (0) target = $region21
    $region20: #{_project_forward.1} parent=1 // pred_region
      _
    $region21: #{_project_forward.1} parent=1 // pred_fallthru
      _
    // Predicated region
    $region22: #{_project_forward.1} parent=1 // pred_check
      _
    $region23: #{_project_forward.1} parent=1 // pred_check_branch
      %211 = sbr.rel (0) target = $region25
    $region24: #{_project_forward.1} parent=1 // pred_region
      _
    $region25: #{_project_forward.1} parent=1 // pred_fallthru
      _
    %212 = vsyncpa [#allocation3], 1

</llo_original>
